<compile_context>
chip_gen: v7x
topology: tpu7x:2x2x1
jax: 0.10.0
libtpu: 0.0.40
codegen_flags: <defaults>
</compile_context>

<pallas_src>
import numpy as np
import jax
import jax.numpy as jnp
from jax.experimental import pallas as pl
from jax.experimental.pallas import tpu as pltpu

_LANES = 128
_ROW_MULT = 32          # int8 label tiles are (32, 128); also covers bf16/f32
_MAX_TR = 2048          # larger tiles give no measurable HBM-roofline gain
_NEG_PAD = -1e9         # padded fg-channel logits -> softmax mass exactly 0


def _round_up(a, b):
    return ((a + b - 1) // b) * b


def _tversky_reduce_kernel(x_ref, t_ref, tps_ref, sp_ref, st_ref):
    # Grid: (P, N, NBP). Spatial axis (last) is the reduction ("arbitrary") axis.
    s = pl.program_id(2)

    @pl.when(s == 0)
    def _():
        tps_ref[...] = jnp.zeros_like(tps_ref)
        sp_ref[...] = jnp.zeros_like(sp_ref)
        st_ref[...] = jnp.zeros_like(st_ref)

    # TODO(synk): on v6e/v7x the channel max could run in bf16 (exact, 2x packed
    #             VALU) before the f32 cast; needs a chip gate since v5e has no
    #             bf16 VALU.
    x = x_ref[0].astype(jnp.float32)          # (C, TR, 128) logits, f32 compute
    lab = t_ref[0].astype(jnp.int32)          # (TR, 128) int8->int32 labels (-1 = pad)

    # softmax over channels: C is the leading (non-vreg) axis -> VPU/EUP only
    m = jnp.max(x, axis=0, keepdims=True)                  # (1, TR, 128)
    e = jnp.exp(x - m)                                     # (C, TR, 128)  EUP
    ssum = jnp.sum(e, axis=0, keepdims=True)               # (1, TR, 128)
    r = pl.reciprocal(ssum, approx=True)                   # EUP slot (idle here)
    r = r * (2.0 - ssum * r)                               # 1 Newton step -> ~f32
    p = e * r                                              # (C, TR, 128)

    # one-hot as a select against a channel iota (no cast, no extra multiply).
    # Padded columns: label -1 matches no channel, and their logits were padded
    # so that all softmax mass lands in (discarded) class 0 -> no mask needed.
    ch = jax.lax.broadcasted_iota(jnp.int32, x.shape, 0)   # (C, TR, 128)
    eq = ch == lab[None]

    # reduce only the row axis; keep the 128 lanes -> lane-dense accumulation
    tps_ref[0, 0] += jnp.sum(jnp.where(eq, p, 0.0), axis=1)    # (C, 128) true pos
    sp_ref[0, 0] += jnp.sum(p, axis=1)                         # (C, 128) sum probs
    st_ref[0, 0] += jnp.sum(jnp.where(eq, 1.0, 0.0), axis=1)   # (C, 128) tgt counts


def tversky_loss_pallas(inputs, targets, alpha, smooth=1.0):
    """inputs: (N, C, D, H, W) float logits; targets: (N, D, H, W) int labels."""
    N, C = int(inputs.shape[0]), int(inputs.shape[1])
    S = int(np.prod(inputs.shape[2:]))
    beta = 2.0 - alpha

    # bf16 logits stay bf16 through the DMA (halves HBM read bytes)
    x_dtype = jnp.bfloat16 if inputs.dtype == jnp.bfloat16 else jnp.float32
    x = inputs.reshape(N, C, S).astype(x_dtype)

    # int8 labels (sentinel -1) cut label HBM bytes 4x; fall back to int32 only
    # if the class count cannot be represented in int8.
    lab_dtype = jnp.int8 if C <= 127 else jnp.int32
    t = targets.reshape(N, S).astype(lab_dtype)

    # ---- per-generation VMEM budgeting --------------------------------------
    try:
        vmem_phys = int(getattr(pltpu.get_tpu_info(), "vmem_capacity_bytes",
                                64 * 1024 * 1024))
    except Exception:
        vmem_phys = 64 * 1024 * 1024                 # v7x-safe fallback
    # v7x (64 MiB physical) -> 48 MiB limit; v5e/v6e (128 MiB) -> 64 MiB limit
    vmem_limit = min(64 * 1024 * 1024, (vmem_phys * 3) // 4)
    tile_budget = (vmem_limit * 3) // 4              # headroom for compiler scratch

    # per-row working set: double-buffered inputs + ~6 live full-tile f32 temps
    bytes_per_row = (
        2 * (C * _LANES * jnp.dtype(x_dtype).itemsize
             + _LANES * jnp.dtype(lab_dtype).itemsize)
        + 6 * C * _LANES * 4)
    tr_cap = max(_ROW_MULT,
                 min(_MAX_TR,
                     (tile_budget // bytes_per_row) // _ROW_MULT * _ROW_MULT))

    # ---- spatial tiling: rows of 128 lanes ----------------------------------
    R = -(-S // _LANES)                              # rows of 128 lanes
    R_r = _round_up(R, _ROW_MULT)

    # Megacore: when N == 1, force a 2-way split of the spatial range (and >= 4
    # spatial steps) so both TensorCores get work and DMA overlaps compute.
    if N == 1 and R_r >= 4 * _ROW_MULT:
        P, min_steps = 2, 2
    else:
        P, min_steps = 1, 1
    nb = _round_up(max(P * min_steps, -(-R_r // tr_cap)), P)
    TR = _round_up(-(-R_r // nb), _ROW_MULT)
    NBP = nb // P
    R_pad = P * NBP * TR
    S_pad = R_pad * _LANES

    if S_pad != S:
        x = jnp.pad(x, ((0, 0), (0, 0), (0, S_pad - S)))
        # Padded columns: class-0 logit stays 0, other classes get -1e9 -> the
        # softmax of a padded column is exactly [1, 0, ..., 0].  All pad mass
        # lands in the background class (dropped by the loss), so the kernel
        # needs no mask and the finalization needs no correction.
        if C > 1:
            x = x.at[:, 1:, S:].set(_NEG_PAD)
        t = jnp.pad(t, ((0, 0), (0, S_pad - S)), constant_values=-1)
    x = x.reshape(N, C, R_pad, _LANES)
    t = t.reshape(N, R_pad, _LANES)

    out_sds = jax.ShapeDtypeStruct((P, N, C, _LANES), jnp.float32)
    out_spec = pl.BlockSpec((1, 1, C, _LANES), lambda p, n, s: (p, n, 0, 0))

    # TODO(synk): merge the 3 accumulators into one (P, N, 3C, 128) output and
    #             try pipeline_mode=pl.Buffered(3) on the logits input if a
    #             profile still shows exposed DMA (expected gain < 5%).
    tps, sp, st = pl.pallas_call(
        _tversky_reduce_kernel,
        out_shape=(out_sds, out_sds, out_sds),
        grid_spec=pltpu.PrefetchScalarGridSpec(
            num_scalar_prefetch=0,
            grid=(P, N, NBP),
            in_specs=[
                pl.BlockSpec((1, C, TR, _LANES),
                             lambda p, n, s: (n, 0, p * NBP + s, 0)),
                pl.BlockSpec((1, TR, _LANES),
                             lambda p, n, s: (n, p * NBP + s, 0)),
            ],
            out_specs=[out_spec, out_spec, out_spec],
        ),
        compiler_params=pltpu.CompilerParams(
            dimension_semantics=("parallel", "parallel", "arbitrary"),
            vmem_limit_bytes=vmem_limit,
        ),
    )(x, t)

    # tiny finalization in plain JAX: lane + part reduce, then tversky ratio
    tps = jnp.sum(tps, axis=(0, 3))                        # (N, C)
    sp = jnp.sum(sp, axis=(0, 3))
    st = jnp.sum(st, axis=(0, 3))

    fps = (sp - tps) * alpha                               # sum(p*(1-onehot))*alpha
    fns = (st - tps) * beta                                # sum((1-p)*onehot)*beta
    loss = (2.0 * tps + smooth) / (2.0 * tps + fps + fns + smooth)
    loss = jnp.mean(loss, axis=0)                          # (C,)
    return 1.0 - jnp.mean(loss[1:])                        # exclude background cls


def tversky_loss_ref(inputs, targets, alpha, smooth=1.0):
    """Pure-JAX reference mirroring the PyTorch module."""
    C = inputs.shape[1]
    beta = 2.0 - alpha
    onehot = jax.nn.one_hot(targets, C, axis=1, dtype=jnp.float32)
    p = jax.nn.softmax(inputs.astype(jnp.float32), axis=1)
    dims = tuple(range(2, inputs.ndim))
    tps = jnp.sum(p * onehot, axis=dims)
    fps = jnp.sum(p * (1.0 - onehot), axis=dims) * alpha
    fns = jnp.sum((1.0 - p) * onehot, axis=dims) * beta
    loss = (2.0 * tps + smooth) / (2.0 * tps + fps + fns + smooth)
    loss = jnp.mean(loss, axis=0)
    return 1.0 - jnp.mean(loss[1:])


if __name__ == "__main__":
    key = jax.random.PRNGKey(0)
    k1, k2, k3, k4, k5, k6 = jax.random.split(key, 6)

    alpha, smooth = 0.7, 1.0

    # 1) main small case (S multiple of 128, f32 logits)
    N, C, D, H, W = 2, 4, 4, 8, 8
    logits = jax.random.normal(k1, (N, C, D, H, W), dtype=jnp.float32)
    labels = jax.random.randint(k2, (N, D, H, W), 0, C, dtype=jnp.int32)
    out = jax.block_until_ready(tversky_loss_pallas(logits, labels, alpha, smooth))
    ref = jax.block_until_ready(tversky_loss_ref(logits, labels, alpha, smooth))
    assert np.allclose(np.asarray(out), np.asarray(ref), rtol=1e-5, atol=1e-5), (out, ref)

    # 2) ragged case exercising the pad path (S = 105, not a multiple of 128)
    N2, C2, D2, H2, W2 = 2, 3, 3, 5, 7
    logits2 = jax.random.normal(k3, (N2, C2, D2, H2, W2), dtype=jnp.float32)
    labels2 = jax.random.randint(k4, (N2, D2, H2, W2), 0, C2, dtype=jnp.int32)
    out2 = jax.block_until_ready(tversky_loss_pallas(logits2, labels2, alpha, smooth))
    ref2 = jax.block_until_ready(tversky_loss_ref(logits2, labels2, alpha, smooth))
    assert np.allclose(np.asarray(out2), np.asarray(ref2), rtol=1e-5, atol=1e-5), (out2, ref2)

    # 3) N == 1 multi-tile case: exercises the P=2 megacore split, multi-step
    #    spatial accumulation, the bf16 DMA path, and int8 labels.
    N3, C3, D3, H3, W3 = 1, 4, 8, 64, 64
    logits3 = jax.random.normal(k5, (N3, C3, D3, H3, W3), dtype=jnp.bfloat16)
    labels3 = jax.random.randint(k6, (N3, D3, H3, W3), 0, C3, dtype=jnp.int32)
    out3 = jax.block_until_ready(tversky_loss_pallas(logits3, labels3, alpha, smooth))
    ref3 = jax.block_until_ready(tversky_loss_ref(logits3, labels3, alpha, smooth))
    assert np.allclose(np.asarray(out3), np.asarray(ref3), rtol=1e-4, atol=1e-4), (out3, ref3)

    print("KERNEL_OK")
</pallas_src>

<mosaic_0001>
module attributes {stable_mosaic.version = 11 : i64} {
  func.func @_tversky_reduce_kernel(%arg0: i32, %arg1: i32, %arg2: i32, %arg3: memref<1x4x32x128xf32, #tpu.memory_space<vmem>>, %arg4: memref<1x32x128xi8, #tpu.memory_space<vmem>>, %arg5: memref<1x1x4x128xf32, #tpu.memory_space<vmem>>, %arg6: memref<1x1x4x128xf32, #tpu.memory_space<vmem>>, %arg7: memref<1x1x4x128xf32, #tpu.memory_space<vmem>>) attributes {dimension_semantics = [#tpu.dimension_semantics<parallel>, #tpu.dimension_semantics<parallel>, #tpu.dimension_semantics<arbitrary>], iteration_bounds = array<i64: 1, 2, 1>, scalar_prefetch = 0 : i64, scratch_operands = 0 : i64, tpu.core_type = #tpu.core_type<tc>, window_params = [{transform_indices = @transform_0, window_bounds = array<i64: 1, 4, 32, 128>}, {transform_indices = @transform_1, window_bounds = array<i64: 1, 32, 128>}, {transform_indices = @transform_2, window_bounds = array<i64: 1, 1, 4, 128>}, {transform_indices = @transform_3, window_bounds = array<i64: 1, 1, 4, 128>}, {transform_indices = @transform_4, window_bounds = array<i64: 1, 1, 4, 128>}]} {
    %c0_i32 = arith.constant 0 : i32
    %0 = arith.cmpi eq, %arg2, %c0_i32 : i32
    %1 = arith.extui %0 : i1 to i32
    %c0_i32_0 = arith.constant 0 : i32
    %2 = arith.cmpi ne, %1, %c0_i32_0 : i32
    scf.if %2 {
      %cst_39 = arith.constant 0.000000e+00 : f32
      %52 = vector.broadcast %cst_39 : f32 to vector<1x1x4x128xf32>
      %c0_40 = arith.constant 0 : index
      %c0_41 = arith.constant 0 : index
      %c0_42 = arith.constant 0 : index
      %c0_43 = arith.constant 0 : index
      %53 = vector.load %arg5[%c0_40, %c0_41, %c0_42, %c0_43] : memref<1x1x4x128xf32, #tpu.memory_space<vmem>>, vector<1x1x4x128xf32>
      tpu.vector_store %arg5[%c0_40, %c0_41, %c0_42, %c0_43], %52 {strides = array<i32>} : memref<1x1x4x128xf32, #tpu.memory_space<vmem>>, vector<1x1x4x128xf32>,
      %cst_44 = arith.constant 0.000000e+00 : f32
      %54 = vector.broadcast %cst_44 : f32 to vector<1x1x4x128xf32>
      %c0_45 = arith.constant 0 : index
      %c0_46 = arith.constant 0 : index
      %c0_47 = arith.constant 0 : index
      %c0_48 = arith.constant 0 : index
      %55 = vector.load %arg6[%c0_45, %c0_46, %c0_47, %c0_48] : memref<1x1x4x128xf32, #tpu.memory_space<vmem>>, vector<1x1x4x128xf32>
      tpu.vector_store %arg6[%c0_45, %c0_46, %c0_47, %c0_48], %54 {strides = array<i32>} : memref<1x1x4x128xf32, #tpu.memory_space<vmem>>, vector<1x1x4x128xf32>,
      %cst_49 = arith.constant 0.000000e+00 : f32
      %56 = vector.broadcast %cst_49 : f32 to vector<1x1x4x128xf32>
      %c0_50 = arith.constant 0 : index
      %c0_51 = arith.constant 0 : index
      %c0_52 = arith.constant 0 : index
      %c0_53 = arith.constant 0 : index
      %57 = vector.load %arg7[%c0_50, %c0_51, %c0_52, %c0_53] : memref<1x1x4x128xf32, #tpu.memory_space<vmem>>, vector<1x1x4x128xf32>
      tpu.vector_store %arg7[%c0_50, %c0_51, %c0_52, %c0_53], %56 {strides = array<i32>} : memref<1x1x4x128xf32, #tpu.memory_space<vmem>>, vector<1x1x4x128xf32>,
    } else {
    }
    %c0 = arith.constant 0 : index
    %c0_1 = arith.constant 0 : index
    %c0_2 = arith.constant 0 : index
    %c0_3 = arith.constant 0 : index
    %3 = vector.load %arg3[%c0, %c0_1, %c0_2, %c0_3] : memref<1x4x32x128xf32, #tpu.memory_space<vmem>>, vector<1x4x32x128xf32>
    %4 = vector.shape_cast %3 : vector<1x4x32x128xf32> to vector<4x32x128xf32>
    %c0_4 = arith.constant 0 : index
    %c0_5 = arith.constant 0 : index
    %c0_6 = arith.constant 0 : index
    %5 = vector.load %arg4[%c0_4, %c0_5, %c0_6] : memref<1x32x128xi8, #tpu.memory_space<vmem>>, vector<1x32x128xi8>
    %6 = vector.shape_cast %5 : vector<1x32x128xi8> to vector<32x128xi8>
    %7 = arith.extsi %6 : vector<32x128xi8> to vector<32x128xi32>
    %cst = arith.constant dense<0xFF800000> : vector<32x128xf32>
    %8 = vector.multi_reduction <maximumf>, %4, %cst [0] : vector<4x32x128xf32> to vector<32x128xf32>
    %9 = vector.shape_cast %8 : vector<32x128xf32> to vector<1x32x128xf32>
    %10 = vector.broadcast %9 : vector<1x32x128xf32> to vector<4x32x128xf32>
    %11 = arith.subf %4, %10 : vector<4x32x128xf32>
    %12 = math.exp %11 : vector<4x32x128xf32>
    %cst_7 = arith.constant dense<0.000000e+00> : vector<32x128xf32>
    %13 = vector.multi_reduction <add>, %12, %cst_7 [0] : vector<4x32x128xf32> to vector<32x128xf32>
    %14 = vector.shape_cast %13 : vector<32x128xf32> to vector<1x32x128xf32>
    %15 = tpu.reciprocal %14 {approx = true} : vector<1x32x128xf32> -> vector<1x32x128xf32>
    %16 = arith.mulf %14, %15 : vector<1x32x128xf32>
    %cst_8 = arith.constant 2.000000e+00 : f32
    %17 = vector.broadcast %cst_8 : f32 to vector<1x32x128xf32>
    %18 = arith.subf %17, %16 : vector<1x32x128xf32>
    %19 = arith.mulf %15, %18 : vector<1x32x128xf32>
    %20 = vector.broadcast %19 : vector<1x32x128xf32> to vector<4x32x128xf32>
    %21 = arith.mulf %12, %20 : vector<4x32x128xf32>
    %22 = tpu.iota {dimensions = array<i32: 0>} : vector<4x32x128xi32>
    %23 = vector.shape_cast %7 : vector<32x128xi32> to vector<1x32x128xi32>
    %24 = vector.broadcast %23 : vector<1x32x128xi32> to vector<4x32x128xi32>
    %25 = arith.cmpi eq, %22, %24 : vector<4x32x128xi32>
    %c0_9 = arith.constant 0 : index
    %c0_10 = arith.constant 0 : index
    %c0_11 = arith.constant 0 : index
    %c0_12 = arith.constant 0 : index
    %26 = vector.load %arg5[%c0_9, %c0_10, %c0_11, %c0_12] : memref<1x1x4x128xf32, #tpu.memory_space<vmem>>, vector<1x1x4x128xf32>
    %27 = vector.shape_cast %26 : vector<1x1x4x128xf32> to vector<4x128xf32>
    %cst_13 = arith.constant 0.000000e+00 : f32
    %28 = vector.broadcast %cst_13 : f32 to vector<4x32x128xf32>
    %29 = arith.select %25, %21, %28 : vector<4x32x128xi1>, vector<4x32x128xf32>
    %cst_14 = arith.constant dense<0.000000e+00> : vector<4x128xf32>
    %30 = vector.multi_reduction <add>, %29, %cst_14 [1] : vector<4x32x128xf32> to vector<4x128xf32>
    %31 = arith.addf %27, %30 : vector<4x128xf32>
    %c0_15 = arith.constant 0 : index
    %c0_16 = arith.constant 0 : index
    %c0_17 = arith.constant 0 : index
    %c0_18 = arith.constant 0 : index
    %32 = vector.load %arg5[%c0_15, %c0_16, %c0_17, %c0_18] : memref<1x1x4x128xf32, #tpu.memory_space<vmem>>, vector<1x1x4x128xf32>
    %33 = vector.shape_cast %32 : vector<1x1x4x128xf32> to vector<4x128xf32>
    %34 = vector.shape_cast %31 : vector<4x128xf32> to vector<1x1x4x128xf32>
    tpu.vector_store %arg5[%c0_15, %c0_16, %c0_17, %c0_18], %34 {strides = array<i32>} : memref<1x1x4x128xf32, #tpu.memory_space<vmem>>, vector<1x1x4x128xf32>,
    %c0_19 = arith.constant 0 : index
    %c0_20 = arith.constant 0 : index
    %c0_21 = arith.constant 0 : index
    %c0_22 = arith.constant 0 : index
    %35 = vector.load %arg6[%c0_19, %c0_20, %c0_21, %c0_22] : memref<1x1x4x128xf32, #tpu.memory_space<vmem>>, vector<1x1x4x128xf32>
    %36 = vector.shape_cast %35 : vector<1x1x4x128xf32> to vector<4x128xf32>
    %cst_23 = arith.constant dense<0.000000e+00> : vector<4x128xf32>
    %37 = vector.multi_reduction <add>, %21, %cst_23 [1] : vector<4x32x128xf32> to vector<4x128xf32>
    %38 = arith.addf %36, %37 : vector<4x128xf32>
    %c0_24 = arith.constant 0 : index
    %c0_25 = arith.constant 0 : index
    %c0_26 = arith.constant 0 : index
    %c0_27 = arith.constant 0 : index
    %39 = vector.load %arg6[%c0_24, %c0_25, %c0_26, %c0_27] : memref<1x1x4x128xf32, #tpu.memory_space<vmem>>, vector<1x1x4x128xf32>
    %40 = vector.shape_cast %39 : vector<1x1x4x128xf32> to vector<4x128xf32>
    %41 = vector.shape_cast %38 : vector<4x128xf32> to vector<1x1x4x128xf32>
    tpu.vector_store %arg6[%c0_24, %c0_25, %c0_26, %c0_27], %41 {strides = array<i32>} : memref<1x1x4x128xf32, #tpu.memory_space<vmem>>, vector<1x1x4x128xf32>,
    %c0_28 = arith.constant 0 : index
    %c0_29 = arith.constant 0 : index
    %c0_30 = arith.constant 0 : index
    %c0_31 = arith.constant 0 : index
    %42 = vector.load %arg7[%c0_28, %c0_29, %c0_30, %c0_31] : memref<1x1x4x128xf32, #tpu.memory_space<vmem>>, vector<1x1x4x128xf32>
    %43 = vector.shape_cast %42 : vector<1x1x4x128xf32> to vector<4x128xf32>
    %cst_32 = arith.constant 1.000000e+00 : f32
    %cst_33 = arith.constant 0.000000e+00 : f32
    %44 = vector.broadcast %cst_32 : f32 to vector<4x32x128xf32>
    %45 = vector.broadcast %cst_33 : f32 to vector<4x32x128xf32>
    %46 = arith.select %25, %44, %45 : vector<4x32x128xi1>, vector<4x32x128xf32>
    %cst_34 = arith.constant dense<0.000000e+00> : vector<4x128xf32>
    %47 = vector.multi_reduction <add>, %46, %cst_34 [1] : vector<4x32x128xf32> to vector<4x128xf32>
    %48 = arith.addf %43, %47 : vector<4x128xf32>
    %c0_35 = arith.constant 0 : index
    %c0_36 = arith.constant 0 : index
    %c0_37 = arith.constant 0 : index
    %c0_38 = arith.constant 0 : index
    %49 = vector.load %arg7[%c0_35, %c0_36, %c0_37, %c0_38] : memref<1x1x4x128xf32, #tpu.memory_space<vmem>>, vector<1x1x4x128xf32>
    %50 = vector.shape_cast %49 : vector<1x1x4x128xf32> to vector<4x128xf32>
    %51 = vector.shape_cast %48 : vector<4x128xf32> to vector<1x1x4x128xf32>
    tpu.vector_store %arg7[%c0_35, %c0_36, %c0_37, %c0_38], %51 {strides = array<i32>} : memref<1x1x4x128xf32, #tpu.memory_space<vmem>>, vector<1x1x4x128xf32>,
    return
  }
  func.func @transform_0(%arg0: i32, %arg1: i32, %arg2: i32) -> (i32, i32, i32, i32) {
    %c1_i32 = arith.constant 1 : i32
    %0 = arith.muli %arg0, %c1_i32 : i32
    %1 = arith.addi %0, %arg2 : i32
    %c0_i32 = arith.constant 0 : i32
    %c0_i32_0 = arith.constant 0 : i32
    %c0_i32_1 = arith.constant 0 : i32
    return %arg1, %c0_i32, %1, %c0_i32_0 : i32, i32, i32, i32
  }
  func.func @transform_1(%arg0: i32, %arg1: i32, %arg2: i32) -> (i32, i32, i32) {
    %c1_i32 = arith.constant 1 : i32
    %0 = arith.muli %arg0, %c1_i32 : i32
    %1 = arith.addi %0, %arg2 : i32
    %c0_i32 = arith.constant 0 : i32
    %c0_i32_0 = arith.constant 0 : i32
    return %arg1, %1, %c0_i32 : i32, i32, i32
  }
  func.func @transform_2(%arg0: i32, %arg1: i32, %arg2: i32) -> (i32, i32, i32, i32) {
    %c0_i32 = arith.constant 0 : i32
    %c0_i32_0 = arith.constant 0 : i32
    %c0_i32_1 = arith.constant 0 : i32
    return %arg0, %arg1, %c0_i32, %c0_i32_0 : i32, i32, i32, i32
  }
  func.func @transform_3(%arg0: i32, %arg1: i32, %arg2: i32) -> (i32, i32, i32, i32) {
    %c0_i32 = arith.constant 0 : i32
    %c0_i32_0 = arith.constant 0 : i32
    %c0_i32_1 = arith.constant 0 : i32
    return %arg0, %arg1, %c0_i32, %c0_i32_0 : i32, i32, i32, i32
  }
  func.func @transform_4(%arg0: i32, %arg1: i32, %arg2: i32) -> (i32, i32, i32, i32) {
    %c0_i32 = arith.constant 0 : i32
    %c0_i32_0 = arith.constant 0 : i32
    %c0_i32_1 = arith.constant 0 : i32
    return %arg0, %arg1, %c0_i32, %c0_i32_0 : i32, i32, i32, i32
  }
}

</mosaic_0001>

<llo_original>
// kernel: tpu_custom_call.1
$region0: #{tpu_custom_call.1}
  #allocation0 [shape = 'u32[]', space=smem, size = 0x4, offset = 0x4, fixed_abs, tag = 'smem constant byte address 0x4 - core index']
  #allocation1 [shape = 'u32[144,128]{1,0:T(1,128)}', space=vmem, size = 0x12000, scoped, tag = 'internal scratch']
  %s0 = inlined_call_operand.hbm [shape: f32[2,4,32,128], index: 0, kind: input, shape index: {}]
  %s1 = inlined_call_operand.hbm [shape: s8[2,32,128], index: 1, kind: input, shape index: {}]
  %s2 = inlined_call_operand.hbm [shape: f32[1,2,4,128], index: 2, kind: output, shape index: {0}]
  %s3 = inlined_call_operand.hbm [shape: f32[1,2,4,128], index: 3, kind: output, shape index: {1}]
  %s4 = inlined_call_operand.hbm [shape: f32[1,2,4,128], index: 4, kind: output, shape index: {2}]
  %5 = xla_tuple %s2, %s3, %s4
  %s6 = sld [smem:[#allocation0]]
  $region69: #{tpu_custom_call.1} parent=0
    _
  %s8 = ssub.s32 1, %s6
  %s9 = scalar_select 0, %s8, %s6
  $region1: #{tpu_custom_call.1} parent=0
    #allocation2 [shape = 'u8[131072]{0}', space=vmem, size = 0x20000, scoped, tag = 'input window, operand 0']
    #allocation3 [shape = 's32[2]{0}', space=sflag, size = 0x8, scoped, tag = 'scoped memory for tpu_custom_call.1']
    #allocation4 [shape = 's32[2]{0}', space=sflag, size = 0x8, scoped, tag = 'scoped memory for tpu_custom_call.1']
    #allocation5 [shape = 'u8[8192]{0}', space=vmem, size = 0x2000, scoped, tag = 'input window, operand 1']
    #allocation6 [shape = 's32[2]{0}', space=sflag, size = 0x8, scoped, tag = 'scoped memory for tpu_custom_call.1']
    #allocation7 [shape = 'u8[4096]{0}', space=vmem, size = 0x1000, scoped, tag = 'output window, operand 0']
    #allocation8 [shape = 'u8[4096]{0}', space=vmem, size = 0x1000, scoped, tag = 'output window, operand 1']
    #allocation9 [shape = 's32[2]{0}', space=sflag, size = 0x8, scoped, tag = 'scoped memory for tpu_custom_call.1']
    #allocation10 [shape = 'u8[4096]{0}', space=vmem, size = 0x1000, scoped, tag = 'output window, operand 2']
    %10 = vsyncpa [#allocation3], 0
    %s11 = scalar_lea.sflag [#allocation3], 1
    %12 = vsyncpa %s11, 0
    %13 = vsyncpa [#allocation6], 0
    %s14 = scalar_lea.sflag [#allocation6], 1
    %15 = vsyncpa %s14, 0
    %16 = vsyncpa [#allocation4], 0
    %s17 = scalar_lea.sflag [#allocation4], 1
    %18 = vsyncpa %s17, 0
    %19 = vsyncpa [#allocation9], 0
    %s20 = scalar_lea.sflag [#allocation9], 1
    %21 = vsyncpa %s20, 0
    loop: start=0, step=1, limit=4
    $region2: #{tpu_custom_call.1} parent=1 // loop_pre_header
      _
    $region3: #{tpu_custom_call.1} parent=1 // loop_header
      %s23 = sphi 0, %s27
      %p24 = scmp.ge.s32.totalorder %s23, 4
      %s30 = sphi 0, %s49
      %s31 = sphi 0, %s45
      %s32 = sphi 0, %s41
      %s33 = sphi 0, %s30
      %s34 = sphi 0, %s31
      %s35 = sphi 0, %s32
      %s36 = sphi 0, %s33
      %s37 = sphi 0, %s34
      %s38 = sphi 0, %s35
      %s56 = sphi 0, %s58
      %s59 = sphi 0, %s56
      %s60 = sphi 0, %s59
      %s76 = sphi 0, %s60
      %s86 = sphi 0, %s88
      %s89 = sphi 0, %s86
      %s90 = sphi 0, %s89
      %s106 = sphi 0, %s90
      %s114 = sphi 0, %s116
      %s117 = sphi 0, %s114
      %s118 = sphi 0, %s117
      %s134 = sphi 0, %s118
      %s142 = sphi 0, %s144
      %s145 = sphi 0, %s142
      %s146 = sphi 0, %s145
      %s162 = sphi 0, %s146
      %s170 = sphi 0, %s172
      %s173 = sphi 0, %s170
      %s174 = sphi 0, %s173
      %s190 = sphi 0, %s174
    $region4: #{tpu_custom_call.1} parent=1 // loop_header_branch
      %26 = sbr.rel (%p24) target = $region8
    $region5: #{tpu_custom_call.1} parent=1 // loop_body
      %s28 = ssub.s32 %s23, 1
      %s29 = ssub.s32 %s23, 2
      %s39 = sadd.s32 1, %s32
      %p40 = scmp.ge.s32.totalorder %s39, 1
      %s41 = scalar_select %p40, 0, %s39
      %s42 = sadd.s32 1, %s31
      %s43 = scalar_select %p40, %s42, %s31
      %p44 = scmp.ge.s32.totalorder %s43, 2
      %s45 = scalar_select %p44, 0, %s43
      %s46 = sadd.s32 1, %s30
      %s47 = scalar_select %p44, %s46, %s30
      %p48 = scmp.ge.s32.totalorder %s47, 1
      %s49 = scalar_select %p48, 0, %s47
      %s50 = sadd.s32 %s30, %s32
      %s51 = sadd.s32 %s49, %s41
      %s52 = ssub.s32 %s31, %s45
      %s53 = ssub.s32 %s50, %s51
      %s54 = sor.u32 %s52, %s53
      %p55 = scmp.eq.s32.totalorder %s54, 0
      %s57 = sadd.s32 %s56, 1
      %s58 = scalar_select %p55, %s56, %s57
      %p61 = pneg %p55
      %p62 = scmp.eq.s32.totalorder %s23, 1
      %p63 = por %p61, %p62
      %p64 = scmp.ne.s32.totalorder %s56, %s59
      %p65 = scmp.eq.s32.totalorder %s23, 0
      %p66 = por %p64, %p65
      %p67 = scmp.ne.s32.totalorder %s56, %s59
      %p68 = scmp.eq.s32.totalorder %s28, 1
      %p69 = por %p67, %p68
      %p70 = scmp.ne.s32.totalorder %s59, %s60
      %p71 = scmp.eq.s32.totalorder %s28, 0
      %p72 = por %p70, %p71
      %p73 = scmp.ne.s32.totalorder %s59, %s60
      %p74 = scmp.eq.s32.totalorder %s29, 1
      %p75 = por %p73, %p74
      %p77 = scmp.ne.s32.totalorder %s60, %s76
      %p78 = scmp.eq.s32.totalorder %s29, 0
      %p79 = por %p77, %p78
      %s80 = sadd.s32 %s30, %s32
      %s81 = sadd.s32 %s49, %s41
      %s82 = ssub.s32 %s31, %s45
      %s83 = ssub.s32 %s80, %s81
      %s84 = sor.u32 %s82, %s83
      %p85 = scmp.eq.s32.totalorder %s84, 0
      %s87 = sadd.s32 %s86, 1
      %s88 = scalar_select %p85, %s86, %s87
      %p91 = pneg %p85
      %p92 = scmp.eq.s32.totalorder %s23, 1
      %p93 = por %p91, %p92
      %p94 = scmp.ne.s32.totalorder %s86, %s89
      %p95 = scmp.eq.s32.totalorder %s23, 0
      %p96 = por %p94, %p95
      %p97 = scmp.ne.s32.totalorder %s86, %s89
      %p98 = scmp.eq.s32.totalorder %s28, 1
      %p99 = por %p97, %p98
      %p100 = scmp.ne.s32.totalorder %s89, %s90
      %p101 = scmp.eq.s32.totalorder %s28, 0
      %p102 = por %p100, %p101
      %p103 = scmp.ne.s32.totalorder %s89, %s90
      %p104 = scmp.eq.s32.totalorder %s29, 1
      %p105 = por %p103, %p104
      %p107 = scmp.ne.s32.totalorder %s90, %s106
      %p108 = scmp.eq.s32.totalorder %s29, 0
      %p109 = por %p107, %p108
      %s110 = ssub.s32 %s30, %s49
      %s111 = ssub.s32 %s31, %s45
      %s112 = sor.u32 %s110, %s111
      %p113 = scmp.eq.s32.totalorder %s112, 0
      %s115 = sadd.s32 %s114, 1
      %s116 = scalar_select %p113, %s114, %s115
      %p119 = pneg %p113
      %p120 = scmp.eq.s32.totalorder %s23, 1
      %p121 = por %p119, %p120
      %p122 = scmp.ne.s32.totalorder %s114, %s117
      %p123 = scmp.eq.s32.totalorder %s23, 0
      %p124 = por %p122, %p123
      %p125 = scmp.ne.s32.totalorder %s114, %s117
      %p126 = scmp.eq.s32.totalorder %s28, 1
      %p127 = por %p125, %p126
      %p128 = scmp.ne.s32.totalorder %s117, %s118
      %p129 = scmp.eq.s32.totalorder %s28, 0
      %p130 = por %p128, %p129
      %p131 = scmp.ne.s32.totalorder %s117, %s118
      %p132 = scmp.eq.s32.totalorder %s29, 1
      %p133 = por %p131, %p132
      %p135 = scmp.ne.s32.totalorder %s118, %s134
      %p136 = scmp.eq.s32.totalorder %s29, 0
      %p137 = por %p135, %p136
      %s138 = ssub.s32 %s30, %s49
      %s139 = ssub.s32 %s31, %s45
      %s140 = sor.u32 %s138, %s139
      %p141 = scmp.eq.s32.totalorder %s140, 0
      %s143 = sadd.s32 %s142, 1
      %s144 = scalar_select %p141, %s142, %s143
      %p147 = pneg %p141
      %p148 = scmp.eq.s32.totalorder %s23, 1
      %p149 = por %p147, %p148
      %p150 = scmp.ne.s32.totalorder %s142, %s145
      %p151 = scmp.eq.s32.totalorder %s23, 0
      %p152 = por %p150, %p151
      %p153 = scmp.ne.s32.totalorder %s142, %s145
      %p154 = scmp.eq.s32.totalorder %s28, 1
      %p155 = por %p153, %p154
      %p156 = scmp.ne.s32.totalorder %s145, %s146
      %p157 = scmp.eq.s32.totalorder %s28, 0
      %p158 = por %p156, %p157
      %p159 = scmp.ne.s32.totalorder %s145, %s146
      %p160 = scmp.eq.s32.totalorder %s29, 1
      %p161 = por %p159, %p160
      %p163 = scmp.ne.s32.totalorder %s146, %s162
      %p164 = scmp.eq.s32.totalorder %s29, 0
      %p165 = por %p163, %p164
      %s166 = ssub.s32 %s30, %s49
      %s167 = ssub.s32 %s31, %s45
      %s168 = sor.u32 %s166, %s167
      %p169 = scmp.eq.s32.totalorder %s168, 0
      %s171 = sadd.s32 %s170, 1
      %s172 = scalar_select %p169, %s170, %s171
      %p175 = pneg %p169
      %p176 = scmp.eq.s32.totalorder %s23, 1
      %p177 = por %p175, %p176
      %p178 = scmp.ne.s32.totalorder %s170, %s173
      %p179 = scmp.eq.s32.totalorder %s23, 0
      %p180 = por %p178, %p179
      %p181 = scmp.ne.s32.totalorder %s170, %s173
      %p182 = scmp.eq.s32.totalorder %s28, 1
      %p183 = por %p181, %p182
      %p184 = scmp.ne.s32.totalorder %s173, %s174
      %p185 = scmp.eq.s32.totalorder %s28, 0
      %p186 = por %p184, %p185
      %p187 = scmp.ne.s32.totalorder %s173, %s174
      %p188 = scmp.eq.s32.totalorder %s29, 1
      %p189 = por %p187, %p188
      %p191 = scmp.ne.s32.totalorder %s174, %s190
      %p192 = scmp.eq.s32.totalorder %s29, 0
      %p193 = por %p191, %p192
      %p194 = scmp.le.s32.totalorder 1, %s23
      %p195 = scmp.lt.s32.totalorder %s23, 3
      %p196 = pnand %p194, %p195
      %p197 = pneg %p196
      // Predicated region
      $region9: #{tpu_custom_call.1} parent=5 // pred_check
        _
      $region10: #{tpu_custom_call.1} parent=5 // pred_check_branch
        %199 = sbr.rel (%p196) target = $region12
      $region11: #{tpu_custom_call.1} parent=5 // pred_region
        %s200 = ssub.s32 %s23, 1
      $region12: #{tpu_custom_call.1} parent=5 // pred_fallthru
        _
      %p201 = scmp.lt.s32.totalorder %s23, 2
      // Predicated region
      $region13: #{tpu_custom_call.1} parent=5 // pred_check
        %p202 = pneg %p201
      $region14: #{tpu_custom_call.1} parent=5 // pred_check_branch
        %204 = sbr.rel (%p202) target = $region16
      $region15: #{tpu_custom_call.1} parent=5 // pred_region
        // Predicated region
        $region17: #{tpu_custom_call.1} parent=15 // pred_check
          %p205 = pneg %p66
        $region18: #{tpu_custom_call.1} parent=15 // pred_check_branch
          %207 = sbr.rel (%p205) target = $region20
        $region19: #{tpu_custom_call.1} parent=15 // pred_region
          %s208 = sand.u32 %s56, 1
          %s209 = scalar_lea.sflag [#allocation3], %s208
          %s210 = sand.u32 %s56, 1
          %s211 = smul.addr %s210, 128
          %s212 = scalar_lea.vmem [#allocation2], %s211
          %s213 = sadd.s32 %s30, %s32
          %s214 = smul.u32 4, %s213
          %s216 = ssub.s32 2048, 2048
          %217 = vsyncadd %s209, %s216
          %s218 = smul.addr %s31, 16
          %s219 = sadd.s32 %s214, %s218
          %s220 = smul.addr %s219, 128
          %s221 = scalar_lea.hbm %s0, %s220
          %s222 = sshll.u32 %s212, 4
          %s223 = int_to_ptr.vmem [resolvable:$true] %s222
          %228 = dma.hbm_to_vmem [thread:$0]  %s221, 2048, %s223, %s209, 128, 128, 8
        $region20: #{tpu_custom_call.1} parent=15 // pred_fallthru
          _
        // Predicated region
        $region21: #{tpu_custom_call.1} parent=15 // pred_check
          %p229 = pneg %p96
        $region22: #{tpu_custom_call.1} parent=15 // pred_check_branch
          %231 = sbr.rel (%p229) target = $region24
        $region23: #{tpu_custom_call.1} parent=15 // pred_region
          %s232 = sand.u32 %s86, 1
          %s233 = scalar_lea.sflag [#allocation6], %s232
          %s234 = sand.u32 %s86, 1
          %s235 = smul.addr %s234, 8
          %s236 = scalar_lea.vmem [#allocation5], %s235
          %s237 = sadd.s32 %s30, %s32
          %s239 = ssub.s32 128, 128
          %240 = vsyncadd %s233, %s239
          %s241 = sadd.s32 %s237, %s31
          %s242 = smul.addr %s241, 128
          %s243 = scalar_lea.hbm %s1, %s242
          %s245 = sshll.u32 %s236, 4
          %s246 = int_to_ptr.vmem [resolvable:$true] %s245
          %248 = dma.hbm_to_vmem [thread:$0]  %s243, 128, %s246, %s233
        $region24: #{tpu_custom_call.1} parent=15 // pred_fallthru
          _
      $region16: #{tpu_custom_call.1} parent=5 // pred_fallthru
        _
      %p249 = scmp.le.s32.totalorder 1, %s23
      %p250 = scmp.lt.s32.totalorder %s23, 3
      %p251 = pnand %p249, %p250
      %p252 = pneg %p251
      // Predicated region
      $region25: #{tpu_custom_call.1} parent=5 // pred_check
        _
      $region26: #{tpu_custom_call.1} parent=5 // pred_check_branch
        %254 = sbr.rel (%p251) target = $region28
      $region27: #{tpu_custom_call.1} parent=5 // pred_region
        %s255 = ssub.s32 %s23, 1
        %s256 = sand.u32 %s59, 1
        %s257 = scalar_lea.sflag [#allocation3], %s256
        %s258 = sand.u32 %s59, 1
        %s259 = smul.addr %s258, 128
        %s260 = scalar_lea.vmem [#allocation2], %s259
        // Predicated region
        $region29: #{tpu_custom_call.1} parent=27 // pred_check
          %p261 = pneg %p72
        $region30: #{tpu_custom_call.1} parent=27 // pred_check_branch
          %263 = sbr.rel (%p261) target = $region32
        $region31: #{tpu_custom_call.1} parent=27 // pred_region
          %264 = dma.done %s257, 2048
        $region32: #{tpu_custom_call.1} parent=27 // pred_fallthru
          _
        %s265 = sand.u32 %s89, 1
        %s266 = scalar_lea.sflag [#allocation6], %s265
        %s267 = sand.u32 %s89, 1
        %s268 = smul.addr %s267, 8
        %s269 = scalar_lea.vmem [#allocation5], %s268
        // Predicated region
        $region33: #{tpu_custom_call.1} parent=27 // pred_check
          %p270 = pneg %p102
        $region34: #{tpu_custom_call.1} parent=27 // pred_check_branch
          %272 = sbr.rel (%p270) target = $region36
        $region35: #{tpu_custom_call.1} parent=27 // pred_region
          %273 = dma.done %s266, 128
        $region36: #{tpu_custom_call.1} parent=27 // pred_fallthru
          _
        %s274 = sand.u32 %s59, 1
        %s275 = scalar_lea.sflag [#allocation3], %s274
        %s276 = sand.u32 %s59, 1
        %s277 = smul.addr %s276, 128
        %s278 = scalar_lea.vmem [#allocation2], %s277
        %p279 = pneg %p72
        %p280 = pneg %p69
        %s281 = sand.u32 %s89, 1
        %s282 = scalar_lea.sflag [#allocation6], %s281
        %s283 = sand.u32 %s89, 1
        %s284 = smul.addr %s283, 8
        %s285 = scalar_lea.vmem [#allocation5], %s284
        %p286 = pneg %p102
        %p287 = pneg %p99
        %p288 = pneg %p130
        %p289 = pneg %p127
        %s290 = sand.u32 %s117, 1
        %s291 = scalar_lea.sflag [#allocation4], %s290
        %s292 = sand.u32 %s117, 1
        %s293 = smul.addr %s292, 4
        %s294 = scalar_lea.vmem [#allocation7], %s293
        %p295 = pneg %p158
        %p296 = pneg %p155
        %s297 = sand.u32 %s28, 1
        %s298 = scalar_lea.sflag [#allocation9], %s297
        %s299 = sand.u32 %s145, 1
        %s300 = smul.addr %s299, 4
        %s301 = scalar_lea.vmem [#allocation8], %s300
        %p302 = pneg %p186
        %p303 = pneg %p183
        %s304 = sand.u32 %s28, 1
        %s305 = scalar_lea.sflag [#allocation9], %s304
        %s306 = sand.u32 %s173, 1
        %s307 = smul.addr %s306, 4
        %s308 = scalar_lea.vmem [#allocation10], %s307
        %s309 = sadd.s32 %s33, %s35
        %s310 = smul.u32 4, %s309
        %s311 = sadd.s32 %s33, %s35
        %p312 = scmp.eq.s32.totalorder %s35, 0
        // Predicated region
        $region37: #{tpu_custom_call.1} parent=27 // pred_check
          %p313 = pneg %p312
        $region38: #{tpu_custom_call.1} parent=27 // pred_check_branch
          %315 = sbr.rel (%p313) target = $region40
        $region39: #{tpu_custom_call.1} parent=27 // pred_region
          %316 = vst [vmem:[%s294] sm:$0xf] 0.0
          %317 = vst [vmem:[%s301] sm:$0xf] 0.0
          %318 = vst [vmem:[%s308] sm:$0xf] 0.0
        $region40: #{tpu_custom_call.1} parent=27 // pred_fallthru
          _
        %v319 = vld [vmem:[%s260] sm:$0xff]
        %v320 = vld [vmem:[%s260 + $0x8] sm:$0xff]
        %v321 = vld [vmem:[%s260 + $0x10] sm:$0xff]
        %v322 = vld [vmem:[%s260 + $0x18] sm:$0xff]
        %v323 = vld [vmem:[%s260 + $0x20] sm:$0xff]
        %v324 = vld [vmem:[%s260 + $0x28] sm:$0xff]
        %v325 = vld [vmem:[%s260 + $0x30] sm:$0xff]
        %v326 = vld [vmem:[%s260 + $0x38] sm:$0xff]
        %v327 = vld [vmem:[%s260 + $0x40] sm:$0xff]
        %v328 = vld [vmem:[%s260 + $0x48] sm:$0xff]
        %v329 = vld [vmem:[%s260 + $0x50] sm:$0xff]
        %v330 = vld [vmem:[%s260 + $0x58] sm:$0xff]
        %v331 = vld [vmem:[%s260 + $0x60] sm:$0xff]
        %v332 = vld [vmem:[%s260 + $0x68] sm:$0xff]
        %v333 = vld [vmem:[%s260 + $0x70] sm:$0xff]
        %v334 = vld [vmem:[%s260 + $0x78] sm:$0xff]
        %v335 = vld [vmem:[%s269] sm:$0xff]
        %v336 = vunpack.c.0.s8 %v335
        %v337 = vunpack.c.1.s8 %v335
        %v338 = vunpack.c.2.s8 %v335
        %v339 = vunpack.c.3.s8 %v335
        %v340 = vmax.f32 %v319, %v323
        %v341 = vmax.f32 %v340, %v327
        %v342 = vmax.f32 %v341, %v331
        %v343 = vmax.f32 %v320, %v324
        %v344 = vmax.f32 %v343, %v328
        %v345 = vmax.f32 %v344, %v332
        %v346 = vmax.f32 %v321, %v325
        %v347 = vmax.f32 %v346, %v329
        %v348 = vmax.f32 %v347, %v333
        %v349 = vmax.f32 %v322, %v326
        %v350 = vmax.f32 %v349, %v330
        %v351 = vmax.f32 %v350, %v334
        %v352 = vsub.f32 %v319, %v342
        %v353 = vsub.f32 %v320, %v345
        %v354 = vsub.f32 %v321, %v348
        %v355 = vsub.f32 %v322, %v351
        %v356 = vsub.f32 %v323, %v342
        %v357 = vsub.f32 %v324, %v345
        %v358 = vsub.f32 %v325, %v348
        %v359 = vsub.f32 %v326, %v351
        %v360 = vsub.f32 %v327, %v342
        %v361 = vsub.f32 %v328, %v345
        %v362 = vsub.f32 %v329, %v348
        %v363 = vsub.f32 %v330, %v351
        %v364 = vsub.f32 %v331, %v342
        %v365 = vsub.f32 %v332, %v345
        %v366 = vsub.f32 %v333, %v348
        %v367 = vsub.f32 %v334, %v351
        %v368 = vmul.f32 %v352, 1.442695
        %v369 = vpow.pop %v368
        %v370 = vmul.f32 %v353, 1.442695
        %v371 = vpow.pop %v370
        %v372 = vmul.f32 %v354, 1.442695
        %v373 = vpow.pop %v372
        %v374 = vmul.f32 %v355, 1.442695
        %v375 = vpow.pop %v374
        %v376 = vmul.f32 %v356, 1.442695
        %v377 = vpow.pop %v376
        %v378 = vmul.f32 %v357, 1.442695
        %v379 = vpow.pop %v378
        %v380 = vmul.f32 %v358, 1.442695
        %v381 = vpow.pop %v380
        %v382 = vmul.f32 %v359, 1.442695
        %v383 = vpow.pop %v382
        %v384 = vmul.f32 %v360, 1.442695
        %v385 = vpow.pop %v384
        %v386 = vmul.f32 %v361, 1.442695
        %v387 = vpow.pop %v386
        %v388 = vmul.f32 %v362, 1.442695
        %v389 = vpow.pop %v388
        %v390 = vmul.f32 %v363, 1.442695
        %v391 = vpow.pop %v390
        %v392 = vmul.f32 %v364, 1.442695
        %v393 = vpow.pop %v392
        %v394 = vmul.f32 %v365, 1.442695
        %v395 = vpow.pop %v394
        %v396 = vmul.f32 %v366, 1.442695
        %v397 = vpow.pop %v396
        %v398 = vmul.f32 %v367, 1.442695
        %v399 = vpow.pop %v398
        %v400 = vadd.f32 %v369, %v377
        %v401 = vadd.f32 %v400, %v385
        %v402 = vadd.f32 %v401, %v393
        %v403 = vadd.f32 %v371, %v379
        %v404 = vadd.f32 %v403, %v387
        %v405 = vadd.f32 %v404, %v395
        %v406 = vadd.f32 %v373, %v381
        %v407 = vadd.f32 %v406, %v389
        %v408 = vadd.f32 %v407, %v397
        %v409 = vadd.f32 %v375, %v383
        %v410 = vadd.f32 %v409, %v391
        %v411 = vadd.f32 %v410, %v399
        %v412 = vrcp.pop %v402
        %v413 = vrcp.pop %v405
        %v414 = vrcp.pop %v408
        %v415 = vrcp.pop %v411
        %v416 = vmul.f32 %v402, %v412
        %v417 = vmul.f32 %v405, %v413
        %v418 = vmul.f32 %v408, %v414
        %v419 = vmul.f32 %v411, %v415
        %v420 = vsub.f32 2.0, %v416
        %v421 = vsub.f32 2.0, %v417
        %v422 = vsub.f32 2.0, %v418
        %v423 = vsub.f32 2.0, %v419
        %v424 = vmul.f32 %v412, %v420
        %v425 = vmul.f32 %v413, %v421
        %v426 = vmul.f32 %v414, %v422
        %v427 = vmul.f32 %v415, %v423
        %v428 = vmul.f32 %v369, %v424
        %v429 = vmul.f32 %v371, %v425
        %v430 = vmul.f32 %v373, %v426
        %v431 = vmul.f32 %v375, %v427
        %v432 = vmul.f32 %v377, %v424
        %v433 = vmul.f32 %v379, %v425
        %v434 = vmul.f32 %v381, %v426
        %v435 = vmul.f32 %v383, %v427
        %v436 = vmul.f32 %v385, %v424
        %v437 = vmul.f32 %v387, %v425
        %v438 = vmul.f32 %v389, %v426
        %v439 = vmul.f32 %v391, %v427
        %v440 = vmul.f32 %v393, %v424
        %v441 = vmul.f32 %v395, %v425
        %v442 = vmul.f32 %v397, %v426
        %v443 = vmul.f32 %v399, %v427
        %vm444 = vcmp.eq.s32.totalorder %v336, 0
        %vm445 = vcmp.eq.s32.totalorder %v337, 0
        %vm446 = vcmp.eq.s32.totalorder %v338, 0
        %vm447 = vcmp.eq.s32.totalorder %v339, 0
        %vm448 = vcmp.eq.s32.totalorder %v336, 1
        %vm449 = vcmp.eq.s32.totalorder %v337, 1
        %vm450 = vcmp.eq.s32.totalorder %v338, 1
        %vm451 = vcmp.eq.s32.totalorder %v339, 1
        %vm452 = vcmp.eq.s32.totalorder %v336, 2
        %vm453 = vcmp.eq.s32.totalorder %v337, 2
        %vm454 = vcmp.eq.s32.totalorder %v338, 2
        %vm455 = vcmp.eq.s32.totalorder %v339, 2
        %vm456 = vcmp.eq.s32.totalorder %v336, 3
        %vm457 = vcmp.eq.s32.totalorder %v337, 3
        %vm458 = vcmp.eq.s32.totalorder %v338, 3
        %vm459 = vcmp.eq.s32.totalorder %v339, 3
        %v460 = vld [vmem:[%s294] sm:$0xf]
        %v461 = vsel %vm444, %v428, 0.0
        %v462 = vsel %vm445, %v429, 0.0
        %v463 = vsel %vm446, %v430, 0.0
        %v464 = vsel %vm447, %v431, 0.0
        %v465 = vsel %vm448, %v432, 0.0
        %v466 = vsel %vm449, %v433, 0.0
        %v467 = vsel %vm450, %v434, 0.0
        %v468 = vsel %vm451, %v435, 0.0
        %v469 = vsel %vm452, %v436, 0.0
        %v470 = vsel %vm453, %v437, 0.0
        %v471 = vsel %vm454, %v438, 0.0
        %v472 = vsel %vm455, %v439, 0.0
        %v473 = vsel %vm456, %v440, 0.0
        %v474 = vsel %vm457, %v441, 0.0
        %v475 = vsel %vm458, %v442, 0.0
        %v476 = vsel %vm459, %v443, 0.0
        %v477 = vadd.f32 %v461, %v462
        %v478 = vadd.f32 %v477, %v463
        %v479 = vadd.f32 %v478, %v464
        %v480 = vrot.slane %v479, 4
        %v481 = vadd.f32 %v479, %v480
        %v482 = vrot.slane %v481, 2
        %v483 = vadd.f32 %v481, %v482
        %v484 = vrot.slane %v483, 1
        %v485 = vadd.f32 %v483, %v484
        %v486 = vadd.f32 %v465, %v466
        %v487 = vadd.f32 %v486, %v467
        %v488 = vadd.f32 %v487, %v468
        %v489 = vrot.slane %v488, 4
        %v490 = vadd.f32 %v488, %v489
        %v491 = vrot.slane %v490, 2
        %v492 = vadd.f32 %v490, %v491
        %v493 = vrot.slane %v492, 1
        %v494 = vadd.f32 %v492, %v493
        %v495 = vadd.f32 %v469, %v470
        %v496 = vadd.f32 %v495, %v471
        %v497 = vadd.f32 %v496, %v472
        %v498 = vrot.slane %v497, 4
        %v499 = vadd.f32 %v497, %v498
        %v500 = vrot.slane %v499, 2
        %v501 = vadd.f32 %v499, %v500
        %v502 = vrot.slane %v501, 1
        %v503 = vadd.f32 %v501, %v502
        %v504 = vadd.f32 %v473, %v474
        %v505 = vadd.f32 %v504, %v475
        %v506 = vadd.f32 %v505, %v476
        %v507 = vrot.slane %v506, 4
        %v508 = vadd.f32 %v506, %v507
        %v509 = vrot.slane %v508, 2
        %v510 = vadd.f32 %v508, %v509
        %v511 = vrot.slane %v510, 1
        %v512 = vadd.f32 %v510, %v511
        %vm517 = vcmask 1041409
        %v518 = vsel %vm517, %v494, %v485
        %vm519 = vcmask 1042434
        %v520 = vsel %vm519, %v503, %v518
        %vm521 = vcmask 1043459
        %v522 = vsel %vm521, %v512, %v520
        %v524 = vadd.f32 %v460, %v522
        %525 = vst [vmem:[%s294] sm:$0xf] %v524
        %v526 = vld [vmem:[%s301] sm:$0xf]
        %v527 = vadd.f32 %v428, %v429
        %v528 = vadd.f32 %v527, %v430
        %v529 = vadd.f32 %v528, %v431
        %v530 = vrot.slane %v529, 4
        %v531 = vadd.f32 %v529, %v530
        %v532 = vrot.slane %v531, 2
        %v533 = vadd.f32 %v531, %v532
        %v534 = vrot.slane %v533, 1
        %v535 = vadd.f32 %v533, %v534
        %v536 = vadd.f32 %v432, %v433
        %v537 = vadd.f32 %v536, %v434
        %v538 = vadd.f32 %v537, %v435
        %v539 = vrot.slane %v538, 4
        %v540 = vadd.f32 %v538, %v539
        %v541 = vrot.slane %v540, 2
        %v542 = vadd.f32 %v540, %v541
        %v543 = vrot.slane %v542, 1
        %v544 = vadd.f32 %v542, %v543
        %v545 = vadd.f32 %v436, %v437
        %v546 = vadd.f32 %v545, %v438
        %v547 = vadd.f32 %v546, %v439
        %v548 = vrot.slane %v547, 4
        %v549 = vadd.f32 %v547, %v548
        %v550 = vrot.slane %v549, 2
        %v551 = vadd.f32 %v549, %v550
        %v552 = vrot.slane %v551, 1
        %v553 = vadd.f32 %v551, %v552
        %v554 = vadd.f32 %v440, %v441
        %v555 = vadd.f32 %v554, %v442
        %v556 = vadd.f32 %v555, %v443
        %v557 = vrot.slane %v556, 4
        %v558 = vadd.f32 %v556, %v557
        %v559 = vrot.slane %v558, 2
        %v560 = vadd.f32 %v558, %v559
        %v561 = vrot.slane %v560, 1
        %v562 = vadd.f32 %v560, %v561
        %v567 = vsel %vm517, %v544, %v535
        %v568 = vsel %vm519, %v553, %v567
        %v569 = vsel %vm521, %v562, %v568
        %v571 = vadd.f32 %v526, %v569
        %572 = vst [vmem:[%s301] sm:$0xf] %v571
        %v573 = vld [vmem:[%s308] sm:$0xf]
        %v574 = vsel %vm444, 1.0, 0.0
        %v575 = vsel %vm445, 1.0, 0.0
        %v576 = vsel %vm446, 1.0, 0.0
        %v577 = vsel %vm447, 1.0, 0.0
        %v578 = vsel %vm448, 1.0, 0.0
        %v579 = vsel %vm449, 1.0, 0.0
        %v580 = vsel %vm450, 1.0, 0.0
        %v581 = vsel %vm451, 1.0, 0.0
        %v582 = vsel %vm452, 1.0, 0.0
        %v583 = vsel %vm453, 1.0, 0.0
        %v584 = vsel %vm454, 1.0, 0.0
        %v585 = vsel %vm455, 1.0, 0.0
        %v586 = vsel %vm456, 1.0, 0.0
        %v587 = vsel %vm457, 1.0, 0.0
        %v588 = vsel %vm458, 1.0, 0.0
        %v589 = vsel %vm459, 1.0, 0.0
        %v590 = vadd.f32 %v574, %v575
        %v591 = vadd.f32 %v590, %v576
        %v592 = vadd.f32 %v591, %v577
        %v593 = vrot.slane %v592, 4
        %v594 = vadd.f32 %v592, %v593
        %v595 = vrot.slane %v594, 2
        %v596 = vadd.f32 %v594, %v595
        %v597 = vrot.slane %v596, 1
        %v598 = vadd.f32 %v596, %v597
        %v599 = vadd.f32 %v578, %v579
        %v600 = vadd.f32 %v599, %v580
        %v601 = vadd.f32 %v600, %v581
        %v602 = vrot.slane %v601, 4
        %v603 = vadd.f32 %v601, %v602
        %v604 = vrot.slane %v603, 2
        %v605 = vadd.f32 %v603, %v604
        %v606 = vrot.slane %v605, 1
        %v607 = vadd.f32 %v605, %v606
        %v608 = vadd.f32 %v582, %v583
        %v609 = vadd.f32 %v608, %v584
        %v610 = vadd.f32 %v609, %v585
        %v611 = vrot.slane %v610, 4
        %v612 = vadd.f32 %v610, %v611
        %v613 = vrot.slane %v612, 2
        %v614 = vadd.f32 %v612, %v613
        %v615 = vrot.slane %v614, 1
        %v616 = vadd.f32 %v614, %v615
        %v617 = vadd.f32 %v586, %v587
        %v618 = vadd.f32 %v617, %v588
        %v619 = vadd.f32 %v618, %v589
        %v620 = vrot.slane %v619, 4
        %v621 = vadd.f32 %v619, %v620
        %v622 = vrot.slane %v621, 2
        %v623 = vadd.f32 %v621, %v622
        %v624 = vrot.slane %v623, 1
        %v625 = vadd.f32 %v623, %v624
        %v630 = vsel %vm517, %v607, %v598
        %v631 = vsel %vm519, %v616, %v630
        %v632 = vsel %vm521, %v625, %v631
        %v634 = vadd.f32 %v573, %v632
        %635 = vst [vmem:[%s308] sm:$0xf] %v634
        %s636 = sand.u32 %s117, 1
        %s637 = scalar_lea.sflag [#allocation4], %s636
        %s638 = sand.u32 %s117, 1
        %s639 = smul.addr %s638, 4
        %s640 = scalar_lea.vmem [#allocation7], %s639
        %s641 = sand.u32 %s28, 1
        %s642 = scalar_lea.sflag [#allocation9], %s641
        %s643 = sand.u32 %s145, 1
        %s644 = smul.addr %s643, 4
        %s645 = scalar_lea.vmem [#allocation8], %s644
        %s646 = sand.u32 %s28, 1
        %s647 = scalar_lea.sflag [#allocation9], %s646
        %s648 = sand.u32 %s173, 1
        %s649 = smul.addr %s648, 4
        %s650 = scalar_lea.vmem [#allocation10], %s649
        // Predicated region
        $region41: #{tpu_custom_call.1} parent=27 // pred_check
          %p651 = pneg %p127
        $region42: #{tpu_custom_call.1} parent=27 // pred_check_branch
          %653 = sbr.rel (%p651) target = $region44
        $region43: #{tpu_custom_call.1} parent=27 // pred_region
          %s655 = ssub.s32 64, 64
          %656 = vsyncadd %s637, %s655
          %s657 = smul.addr %s33, 2
          %s658 = sadd.s32 %s34, %s657
          %s659 = smul.addr %s658, 64
          %s660 = scalar_lea.hbm %s2, %s659
          %s662 = sshll.u32 %s640, 4
          %s663 = int_to_ptr.vmem [resolvable:$true] %s662
          %665 = dma.vmem_to_hbm [thread:$0]  %s663, 64, %s660, %s637
        $region44: #{tpu_custom_call.1} parent=27 // pred_fallthru
          _
        // Predicated region
        $region45: #{tpu_custom_call.1} parent=27 // pred_check
          %p666 = pneg %p155
        $region46: #{tpu_custom_call.1} parent=27 // pred_check_branch
          %668 = sbr.rel (%p666) target = $region48
        $region47: #{tpu_custom_call.1} parent=27 // pred_region
          %s670 = ssub.s32 64, 64
          %671 = vsyncadd %s642, %s670
          %s672 = smul.addr %s33, 2
          %s673 = sadd.s32 %s34, %s672
          %s674 = smul.addr %s673, 64
          %s675 = scalar_lea.hbm %s3, %s674
          %s677 = sshll.u32 %s645, 4
          %s678 = int_to_ptr.vmem [resolvable:$true] %s677
          %680 = dma.vmem_to_hbm [thread:$0]  %s678, 64, %s675, %s642
        $region48: #{tpu_custom_call.1} parent=27 // pred_fallthru
          _
        // Predicated region
        $region49: #{tpu_custom_call.1} parent=27 // pred_check
          %p681 = pneg %p183
        $region50: #{tpu_custom_call.1} parent=27 // pred_check_branch
          %683 = sbr.rel (%p681) target = $region52
        $region51: #{tpu_custom_call.1} parent=27 // pred_region
          %s685 = ssub.s32 64, 64
          %686 = vsyncadd %s647, %s685
          %s687 = smul.addr %s33, 2
          %s688 = sadd.s32 %s34, %s687
          %s689 = smul.addr %s688, 64
          %s690 = scalar_lea.hbm %s4, %s689
          %s692 = sshll.u32 %s650, 4
          %s693 = int_to_ptr.vmem [resolvable:$true] %s692
          %695 = dma.vmem_to_hbm [thread:$0]  %s693, 64, %s690, %s647
        $region52: #{tpu_custom_call.1} parent=27 // pred_fallthru
          _
      $region28: #{tpu_custom_call.1} parent=5 // pred_fallthru
        _
      %p696 = scmp.le.s32.totalorder 2, %s23
      // Predicated region
      $region53: #{tpu_custom_call.1} parent=5 // pred_check
        %p697 = pneg %p696
      $region54: #{tpu_custom_call.1} parent=5 // pred_check_branch
        %699 = sbr.rel (%p697) target = $region56
      $region55: #{tpu_custom_call.1} parent=5 // pred_region
        %s700 = ssub.s32 %s23, 2
        // Predicated region
        $region57: #{tpu_custom_call.1} parent=55 // pred_check
          %p701 = pneg %p133
        $region58: #{tpu_custom_call.1} parent=55 // pred_check_branch
          %703 = sbr.rel (%p701) target = $region60
        $region59: #{tpu_custom_call.1} parent=55 // pred_region
          %s704 = sand.u32 %s118, 1
          %s705 = scalar_lea.sflag [#allocation4], %s704
          %s706 = sand.u32 %s118, 1
          %s707 = smul.addr %s706, 4
          %s708 = scalar_lea.vmem [#allocation7], %s707
          %709 = dma.done %s705, 64
        $region60: #{tpu_custom_call.1} parent=55 // pred_fallthru
          _
        // Predicated region
        $region61: #{tpu_custom_call.1} parent=55 // pred_check
          %p710 = pneg %p161
        $region62: #{tpu_custom_call.1} parent=55 // pred_check_branch
          %712 = sbr.rel (%p710) target = $region64
        $region63: #{tpu_custom_call.1} parent=55 // pred_region
          %s713 = sand.u32 %s29, 1
          %s714 = scalar_lea.sflag [#allocation9], %s713
          %s715 = sand.u32 %s146, 1
          %s716 = smul.addr %s715, 4
          %s717 = scalar_lea.vmem [#allocation8], %s716
          %718 = dma.done %s714, 64
        $region64: #{tpu_custom_call.1} parent=55 // pred_fallthru
          _
        // Predicated region
        $region65: #{tpu_custom_call.1} parent=55 // pred_check
          %p719 = pneg %p189
        $region66: #{tpu_custom_call.1} parent=55 // pred_check_branch
          %721 = sbr.rel (%p719) target = $region68
        $region67: #{tpu_custom_call.1} parent=55 // pred_region
          %s722 = sand.u32 %s29, 1
          %s723 = scalar_lea.sflag [#allocation9], %s722
          %s724 = sand.u32 %s174, 1
          %s725 = smul.addr %s724, 4
          %s726 = scalar_lea.vmem [#allocation10], %s725
          %727 = dma.done %s723, 64
        $region68: #{tpu_custom_call.1} parent=55 // pred_fallthru
          _
      $region56: #{tpu_custom_call.1} parent=5 // pred_fallthru
        _
    $region6: #{tpu_custom_call.1} parent=1 // loop_footer
      %s27 = sadd.s32 1, %s23
    $region7: #{tpu_custom_call.1} parent=1 // loop_footer_branch
      %22 = sbr.rel target = $region3
    $region8: #{tpu_custom_call.1} parent=1 // loop_exit
      _
    %728 = vsyncpa [#allocation3], 1
    %s729 = scalar_lea.sflag [#allocation3], 1
    %730 = vsyncpa %s729, 1
    %731 = vsyncpa [#allocation6], 1
    %s732 = scalar_lea.sflag [#allocation6], 1
    %733 = vsyncpa %s732, 1
    %734 = vsyncpa [#allocation4], 1
    %s735 = scalar_lea.sflag [#allocation4], 1
    %736 = vsyncpa %s735, 1
    %737 = vsyncpa [#allocation9], 1
    %s738 = scalar_lea.sflag [#allocation9], 1
    %739 = vsyncpa %s738, 1

</llo_original>
